<compile_context>
chip_gen: v7x
topology: tpu7x:2x2x1
jax: 0.10.0
libtpu: 0.0.40
codegen_flags: <defaults>
</compile_context>

<pallas_src>
import functools

import jax
import jax.numpy as jnp
from jax.experimental import pallas as pl
from jax.experimental.pallas import tpu as pltpu


# Safe on every generation: v5e/v6e have 128 MiB physical VMEM, v7x has 64 MiB.
_VMEM_LIMIT_BYTES = 48 * 1024 * 1024


def _pick_seq_tile(S, H):
    """S-tile so that one f32 (tS, H) slab is <= ~2 MiB, tS % 8 == 0 (or tS == S),
    and tS divides S evenly (so no remainder masking is needed)."""
    budget_bytes = 2 * 1024 * 1024
    cap = max(8, budget_bytes // (H * 4))
    cap = min(cap, 512)
    if S <= cap:
        return S
    t = (cap // 8) * 8
    while t >= 8:
        if S % t == 0:
            return t
        t -= 8
    return S  # full extent is always a legal block shape


def _seq_mean_kernel(x_ref, u_ref, *, inv_seq_len):
    """Pass 1: u = mean over the sequence axis, accumulated across S-tiles.

    x_ref: (1, tS, H) tile; u_ref: (1, 1, H) f32 output, resident across the
    s grid axis (constant index_map) -> used directly as the accumulator."""
    s_idx = pl.program_id(1)

    @pl.when(s_idx == 0)
    def _():
        u_ref[...] = jnp.zeros_like(u_ref)

    u_ref[...] += jnp.sum(x_ref[...].astype(jnp.float32), axis=1, keepdims=True)

    @pl.when(s_idx == pl.num_programs(1) - 1)
    def _():
        u_ref[...] *= jnp.float32(inv_seq_len)


def _layernorm_apply_kernel(x_ref, u_ref, gamma_ref, beta_ref, o_ref, *, eps):
    """Pass 2: y = (x - u) * rsqrt(mean((x-u)^2, last) + eps); out = gamma*y + beta.

    x_ref/o_ref: (1, tS, H); u_ref: (1, 1, H) f32; gamma/beta: (1, H)."""
    # Single live full-tile f32 temporary (xc); everything else folds into it.
    xc = x_ref[...].astype(jnp.float32) - u_ref[...]              # (1, tS, H)
    s = jnp.mean(xc * xc, axis=-1, keepdims=True)                  # (1, tS, 1)
    scale = jax.lax.rsqrt(s + jnp.float32(eps))                    # eps inside sqrt
    gamma = gamma_ref[...].astype(jnp.float32)[None]               # (1, 1, H)
    beta = beta_ref[...].astype(jnp.float32)[None]                 # (1, 1, H)
    o_ref[...] = ((xc * scale) * gamma + beta).astype(o_ref.dtype)


def layernorm_custom(x, gamma, beta, variance_epsilon=1e-12):
    """x: (B, S, H); gamma/beta: (H,). Matches LayerNormCustom.forward."""
    B, S, H = x.shape
    tS = _pick_seq_tile(S, H)
    nS = S // tS
    itemsize = jnp.dtype(x.dtype).itemsize

    gamma2d = gamma.reshape(1, H)
    beta2d = beta.reshape(1, H)

    # ---- Pass 1: per-batch sequence mean u: (B, 1, H), f32 -------------------
    u = pl.pallas_call(
        functools.partial(_seq_mean_kernel, inv_seq_len=1.0 / float(S)),
        out_shape=jax.ShapeDtypeStruct((B, 1, H), jnp.float32),
        grid_spec=pltpu.PrefetchScalarGridSpec(
            num_scalar_prefetch=0,
            grid=(B, nS),
            in_specs=[
                pl.BlockSpec((1, tS, H), lambda b, s: (b, s, 0)),
            ],
            out_specs=pl.BlockSpec((1, 1, H), lambda b, s: (b, 0, 0)),
        ),
        compiler_params=pltpu.CompilerParams(
            dimension_semantics=("parallel", "arbitrary"),
            vmem_limit_bytes=_VMEM_LIMIT_BYTES,
        ),
        cost_estimate=pl.CostEstimate(
            flops=B * S * H,
            transcendentals=0,
            bytes_accessed=B * S * H * itemsize + B * H * 4,
        ),
    )(x)

    # ---- Pass 2: normalize + affine, tiled over (B, S//tS) ------------------
    out = pl.pallas_call(
        functools.partial(_layernorm_apply_kernel, eps=float(variance_epsilon)),
        out_shape=jax.ShapeDtypeStruct((B, S, H), x.dtype),
        grid_spec=pltpu.PrefetchScalarGridSpec(
            num_scalar_prefetch=0,
            grid=(B, nS),
            in_specs=[
                pl.BlockSpec((1, tS, H), lambda b, s: (b, s, 0)),   # x tile
                pl.BlockSpec((1, 1, H), lambda b, s: (b, 0, 0)),    # u (const over s)
                pl.BlockSpec((1, H), lambda b, s: (0, 0)),          # gamma (replicated)
                pl.BlockSpec((1, H), lambda b, s: (0, 0)),          # beta  (replicated)
            ],
            out_specs=pl.BlockSpec((1, tS, H), lambda b, s: (b, s, 0)),
        ),
        compiler_params=pltpu.CompilerParams(
            dimension_semantics=("parallel", "parallel"),
            vmem_limit_bytes=_VMEM_LIMIT_BYTES,
        ),
        cost_estimate=pl.CostEstimate(
            flops=6 * B * S * H,
            transcendentals=B * S,
            bytes_accessed=2 * B * S * H * itemsize + B * H * 4 + 2 * H * 4,
        ),
    )(x, u, gamma2d, beta2d)

    return out


def _reference(x, gamma, beta, eps=1e-12):
    xf = x.astype(jnp.float32)
    u = jnp.mean(xf, axis=1, keepdims=True)
    s = jnp.mean((xf - u) ** 2, axis=-1, keepdims=True)
    y = (xf - u) / jnp.sqrt(s + eps)
    return (gamma * y + beta).astype(x.dtype)


if __name__ == "__main__":
    B, S, H = 2, 8, 32
    key = jax.random.PRNGKey(0)
    x = jax.random.normal(key, (B, S, H), dtype=jnp.float32)

    # Deterministic parameter init matching the module's __init__.
    gamma = jnp.ones((H,), dtype=jnp.float32)
    beta = jnp.zeros((H,), dtype=jnp.float32)

    out = layernorm_custom(x, gamma, beta, variance_epsilon=1e-12)
    out = jax.block_until_ready(out)

    ref = _reference(x, gamma, beta)
    assert out.shape == (B, S, H)
    assert jnp.allclose(out, ref, atol=1e-5, rtol=1e-5), "mismatch vs reference"

    print("KERNEL_OK")
</pallas_src>

<mosaic_0001>
module attributes {stable_mosaic.version = 11 : i64} {
  func.func @_seq_mean_kernel(%arg0: i32, %arg1: i32, %arg2: memref<1x8x32xf32, #tpu.memory_space<vmem>>, %arg3: memref<1x1x32xf32, #tpu.memory_space<vmem>>) attributes {dimension_semantics = [#tpu.dimension_semantics<parallel>, #tpu.dimension_semantics<arbitrary>], iteration_bounds = array<i64: 2, 1>, scalar_prefetch = 0 : i64, scratch_operands = 0 : i64, tpu.core_type = #tpu.core_type<tc>, window_params = [{transform_indices = @transform_0, window_bounds = array<i64: 1, 8, 32>}, {transform_indices = @transform_1, window_bounds = array<i64: 1, 1, 32>}]} {
    %c0_i32 = arith.constant 0 : i32
    %0 = arith.cmpi eq, %arg1, %c0_i32 : i32
    %1 = arith.extui %0 : i1 to i32
    %c0_i32_0 = arith.constant 0 : i32
    %2 = arith.cmpi ne, %1, %c0_i32_0 : i32
    scf.if %2 {
      %cst_11 = arith.constant 0.000000e+00 : f32
      %12 = vector.broadcast %cst_11 : f32 to vector<1x1x32xf32>
      %c0_12 = arith.constant 0 : index
      %c0_13 = arith.constant 0 : index
      %c0_14 = arith.constant 0 : index
      %13 = vector.load %arg3[%c0_12, %c0_13, %c0_14] : memref<1x1x32xf32, #tpu.memory_space<vmem>>, vector<1x1x32xf32>
      tpu.vector_store %arg3[%c0_12, %c0_13, %c0_14], %12 {strides = array<i32>} : memref<1x1x32xf32, #tpu.memory_space<vmem>>, vector<1x1x32xf32>,
    } else {
    }
    %c0 = arith.constant 0 : index
    %c0_1 = arith.constant 0 : index
    %c0_2 = arith.constant 0 : index
    %3 = vector.load %arg3[%c0, %c0_1, %c0_2] : memref<1x1x32xf32, #tpu.memory_space<vmem>>, vector<1x1x32xf32>
    %c0_3 = arith.constant 0 : index
    %c0_4 = arith.constant 0 : index
    %c0_5 = arith.constant 0 : index
    %4 = vector.load %arg2[%c0_3, %c0_4, %c0_5] : memref<1x8x32xf32, #tpu.memory_space<vmem>>, vector<1x8x32xf32>
    %cst = arith.constant dense<0.000000e+00> : vector<1x32xf32>
    %5 = vector.multi_reduction <add>, %4, %cst [1] : vector<1x8x32xf32> to vector<1x32xf32>
    %6 = vector.shape_cast %5 : vector<1x32xf32> to vector<1x1x32xf32>
    %7 = arith.addf %3, %6 : vector<1x1x32xf32>
    %c0_6 = arith.constant 0 : index
    %c0_7 = arith.constant 0 : index
    %c0_8 = arith.constant 0 : index
    %8 = vector.load %arg3[%c0_6, %c0_7, %c0_8] : memref<1x1x32xf32, #tpu.memory_space<vmem>>, vector<1x1x32xf32>
    tpu.vector_store %arg3[%c0_6, %c0_7, %c0_8], %7 {strides = array<i32>} : memref<1x1x32xf32, #tpu.memory_space<vmem>>, vector<1x1x32xf32>,
    %c0_i32_9 = arith.constant 0 : i32
    %9 = arith.cmpi eq, %arg1, %c0_i32_9 : i32
    %10 = arith.extui %9 : i1 to i32
    %c0_i32_10 = arith.constant 0 : i32
    %11 = arith.cmpi ne, %10, %c0_i32_10 : i32
    scf.if %11 {
      %c0_11 = arith.constant 0 : index
      %c0_12 = arith.constant 0 : index
      %c0_13 = arith.constant 0 : index
      %12 = vector.load %arg3[%c0_11, %c0_12, %c0_13] : memref<1x1x32xf32, #tpu.memory_space<vmem>>, vector<1x1x32xf32>
      %cst_14 = arith.constant 1.250000e-01 : f32
      %13 = vector.broadcast %cst_14 : f32 to vector<1x1x32xf32>
      %14 = arith.mulf %12, %13 : vector<1x1x32xf32>
      %c0_15 = arith.constant 0 : index
      %c0_16 = arith.constant 0 : index
      %c0_17 = arith.constant 0 : index
      %15 = vector.load %arg3[%c0_15, %c0_16, %c0_17] : memref<1x1x32xf32, #tpu.memory_space<vmem>>, vector<1x1x32xf32>
      tpu.vector_store %arg3[%c0_15, %c0_16, %c0_17], %14 {strides = array<i32>} : memref<1x1x32xf32, #tpu.memory_space<vmem>>, vector<1x1x32xf32>,
    } else {
    }
    return
  }
  func.func @transform_0(%arg0: i32, %arg1: i32) -> (i32, i32, i32) {
    %c0_i32 = arith.constant 0 : i32
    %c0_i32_0 = arith.constant 0 : i32
    return %arg0, %arg1, %c0_i32 : i32, i32, i32
  }
  func.func @transform_1(%arg0: i32, %arg1: i32) -> (i32, i32, i32) {
    %c0_i32 = arith.constant 0 : i32
    %c0_i32_0 = arith.constant 0 : i32
    %c0_i32_1 = arith.constant 0 : i32
    return %arg0, %c0_i32, %c0_i32_0 : i32, i32, i32
  }
}

</mosaic_0001>

<llo_original>
// kernel: tpu_custom_call.1
$region0: #{tpu_custom_call.1}
  #allocation0 [shape = 'u32[]', space=smem, size = 0x4, offset = 0x4, fixed_abs, tag = 'smem constant byte address 0x4 - core index']
  #allocation1 [shape = 'u32[144,128]{1,0:T(1,128)}', space=vmem, size = 0x12000, scoped, tag = 'internal scratch']
  %s0 = inlined_call_operand.hbm [shape: f32[2,8,32], index: 0, kind: input, shape index: {}]
  %s1 = inlined_call_operand.hbm [shape: f32[2,1,32], index: 1, kind: output, shape index: {}]
  %s2 = sld [smem:[#allocation0]]
  $region49: #{tpu_custom_call.1} parent=0
    _
  %s4 = ssub.s32 1, %s2
  %s5 = scalar_select 0, %s4, %s2
  $region1: #{tpu_custom_call.1} parent=0
    #allocation2 [shape = 'u8[8192]{0}', space=vmem, size = 0x2000, scoped, tag = 'input window, operand 0']
    #allocation3 [shape = 's32[2]{0}', space=sflag, size = 0x8, scoped, tag = 'scoped memory for tpu_custom_call.1']
    #allocation4 [shape = 's32[2]{0}', space=sflag, size = 0x8, scoped, tag = 'scoped memory for tpu_custom_call.1']
    #allocation5 [shape = 'u8[1024]{0}', space=vmem, size = 0x400, scoped, tag = 'output window, operand 0']
    %6 = vsyncpa [#allocation3], 0
    %s7 = scalar_lea.sflag [#allocation3], 1
    %8 = vsyncpa %s7, 0
    %9 = vsyncpa [#allocation4], 0
    %s10 = scalar_lea.sflag [#allocation4], 1
    %11 = vsyncpa %s10, 0
    loop: start=0, step=1, limit=4
    $region2: #{tpu_custom_call.1} parent=1 // loop_pre_header
      _
    $region3: #{tpu_custom_call.1} parent=1 // loop_header
      %s13 = sphi 0, %s17
      %p14 = scmp.ge.s32.totalorder %s13, 4
      %s20 = sphi 0, %s32
      %s21 = sphi 0, %s28
      %s22 = sphi 0, %s20
      %s23 = sphi 0, %s21
      %s24 = sphi 0, %s22
      %s25 = sphi 0, %s23
      %s37 = sphi 0, %s39
      %s40 = sphi 0, %s37
      %s41 = sphi 0, %s40
      %s57 = sphi 0, %s41
      %s63 = sphi 0, %s65
      %s66 = sphi 0, %s63
      %s67 = sphi 0, %s66
      %s83 = sphi 0, %s67
    $region4: #{tpu_custom_call.1} parent=1 // loop_header_branch
      %16 = sbr.rel (%p14) target = $region8
    $region5: #{tpu_custom_call.1} parent=1 // loop_body
      %s18 = ssub.s32 %s13, 1
      %s19 = ssub.s32 %s13, 2
      %s26 = sadd.s32 1, %s21
      %p27 = scmp.ge.s32.totalorder %s26, 1
      %s28 = scalar_select %p27, 0, %s26
      %s29 = sadd.s32 1, %s20
      %s30 = scalar_select %p27, %s29, %s20
      %p31 = scmp.ge.s32.totalorder %s30, 2
      %s32 = scalar_select %p31, 0, %s30
      %s33 = ssub.s32 %s20, %s32
      %s34 = ssub.s32 %s21, %s28
      %s35 = sor.u32 %s33, %s34
      %p36 = scmp.eq.s32.totalorder %s35, 0
      %s38 = sadd.s32 %s37, 1
      %s39 = scalar_select %p36, %s37, %s38
      %p42 = pneg %p36
      %p43 = scmp.eq.s32.totalorder %s13, 1
      %p44 = por %p42, %p43
      %p45 = scmp.ne.s32.totalorder %s37, %s40
      %p46 = scmp.eq.s32.totalorder %s13, 0
      %p47 = por %p45, %p46
      %p48 = scmp.ne.s32.totalorder %s37, %s40
      %p49 = scmp.eq.s32.totalorder %s18, 1
      %p50 = por %p48, %p49
      %p51 = scmp.ne.s32.totalorder %s40, %s41
      %p52 = scmp.eq.s32.totalorder %s18, 0
      %p53 = por %p51, %p52
      %p54 = scmp.ne.s32.totalorder %s40, %s41
      %p55 = scmp.eq.s32.totalorder %s19, 1
      %p56 = por %p54, %p55
      %p58 = scmp.ne.s32.totalorder %s41, %s57
      %p59 = scmp.eq.s32.totalorder %s19, 0
      %p60 = por %p58, %p59
      %s61 = ssub.s32 %s20, %s32
      %p62 = scmp.eq.s32.totalorder %s61, 0
      %s64 = sadd.s32 %s63, 1
      %s65 = scalar_select %p62, %s63, %s64
      %p68 = pneg %p62
      %p69 = scmp.eq.s32.totalorder %s13, 1
      %p70 = por %p68, %p69
      %p71 = scmp.ne.s32.totalorder %s63, %s66
      %p72 = scmp.eq.s32.totalorder %s13, 0
      %p73 = por %p71, %p72
      %p74 = scmp.ne.s32.totalorder %s63, %s66
      %p75 = scmp.eq.s32.totalorder %s18, 1
      %p76 = por %p74, %p75
      %p77 = scmp.ne.s32.totalorder %s66, %s67
      %p78 = scmp.eq.s32.totalorder %s18, 0
      %p79 = por %p77, %p78
      %p80 = scmp.ne.s32.totalorder %s66, %s67
      %p81 = scmp.eq.s32.totalorder %s19, 1
      %p82 = por %p80, %p81
      %p84 = scmp.ne.s32.totalorder %s67, %s83
      %p85 = scmp.eq.s32.totalorder %s19, 0
      %p86 = por %p84, %p85
      %p87 = scmp.le.s32.totalorder 1, %s13
      %p88 = scmp.lt.s32.totalorder %s13, 3
      %p89 = pnand %p87, %p88
      %p90 = pneg %p89
      // Predicated region
      $region9: #{tpu_custom_call.1} parent=5 // pred_check
        _
      $region10: #{tpu_custom_call.1} parent=5 // pred_check_branch
        %92 = sbr.rel (%p89) target = $region12
      $region11: #{tpu_custom_call.1} parent=5 // pred_region
        %s93 = ssub.s32 %s13, 1
      $region12: #{tpu_custom_call.1} parent=5 // pred_fallthru
        _
      %p94 = scmp.lt.s32.totalorder %s13, 2
      // Predicated region
      $region13: #{tpu_custom_call.1} parent=5 // pred_check
        %p95 = pneg %p94
      $region14: #{tpu_custom_call.1} parent=5 // pred_check_branch
        %97 = sbr.rel (%p95) target = $region16
      $region15: #{tpu_custom_call.1} parent=5 // pred_region
        // Predicated region
        $region17: #{tpu_custom_call.1} parent=15 // pred_check
          %p98 = pneg %p47
        $region18: #{tpu_custom_call.1} parent=15 // pred_check_branch
          %100 = sbr.rel (%p98) target = $region20
        $region19: #{tpu_custom_call.1} parent=15 // pred_region
          %s101 = sand.u32 %s37, 1
          %s102 = scalar_lea.sflag [#allocation3], %s101
          %s103 = sand.u32 %s37, 1
          %s104 = smul.addr %s103, 8
          %s105 = scalar_lea.vmem [#allocation2], %s104
          %s107 = ssub.s32 128, 128
          %108 = vsyncadd %s102, %s107
          %s109 = sadd.s32 %s21, %s20
          %s110 = smul.addr %s109, 128
          %s111 = scalar_lea.hbm %s0, %s110
          %s113 = sshll.u32 %s105, 4
          %s114 = int_to_ptr.vmem [resolvable:$true] %s113
          %116 = dma.hbm_to_vmem [thread:$0]  %s111, 128, %s114, %s102
        $region20: #{tpu_custom_call.1} parent=15 // pred_fallthru
          _
      $region16: #{tpu_custom_call.1} parent=5 // pred_fallthru
        _
      %p117 = scmp.le.s32.totalorder 1, %s13
      %p118 = scmp.lt.s32.totalorder %s13, 3
      %p119 = pnand %p117, %p118
      %p120 = pneg %p119
      // Predicated region
      $region21: #{tpu_custom_call.1} parent=5 // pred_check
        _
      $region22: #{tpu_custom_call.1} parent=5 // pred_check_branch
        %122 = sbr.rel (%p119) target = $region24
      $region23: #{tpu_custom_call.1} parent=5 // pred_region
        %s123 = ssub.s32 %s13, 1
        %s124 = sand.u32 %s40, 1
        %s125 = scalar_lea.sflag [#allocation3], %s124
        %s126 = sand.u32 %s40, 1
        %s127 = smul.addr %s126, 8
        %s128 = scalar_lea.vmem [#allocation2], %s127
        // Predicated region
        $region25: #{tpu_custom_call.1} parent=23 // pred_check
          %p129 = pneg %p53
        $region26: #{tpu_custom_call.1} parent=23 // pred_check_branch
          %131 = sbr.rel (%p129) target = $region28
        $region27: #{tpu_custom_call.1} parent=23 // pred_region
          %132 = dma.done %s125, 128
        $region28: #{tpu_custom_call.1} parent=23 // pred_fallthru
          _
        %s133 = sand.u32 %s40, 1
        %s134 = scalar_lea.sflag [#allocation3], %s133
        %s135 = sand.u32 %s40, 1
        %s136 = smul.addr %s135, 8
        %s137 = scalar_lea.vmem [#allocation2], %s136
        %p138 = pneg %p53
        %p139 = pneg %p50
        %p140 = pneg %p79
        %p141 = pneg %p76
        %s142 = sand.u32 %s66, 1
        %s143 = scalar_lea.sflag [#allocation4], %s142
        %s144 = sand.u32 %s66, 1
        %s145 = scalar_lea.vmem [#allocation5], %s144
        %p146 = scmp.eq.s32.totalorder %s23, 0
        // Predicated region
        $region29: #{tpu_custom_call.1} parent=23 // pred_check
          %p147 = pneg %p146
        $region30: #{tpu_custom_call.1} parent=23 // pred_check_branch
          %149 = sbr.rel (%p147) target = $region32
        $region31: #{tpu_custom_call.1} parent=23 // pred_region
          %vm150 = vcmask 253952
          %151 = vst.msk [vmem:[%s145] sm:$0x1] %vm150, 0.0
        $region32: #{tpu_custom_call.1} parent=23 // pred_fallthru
          _
        %v152 = vld [vmem:[%s145] sm:$0x1]
        %v153 = vld [vmem:[%s128] sm:$0xff]
        %vm154 = vcmask 261120
        %v155 = vsel %vm154, %v153, 0.0
        %v156 = vrot.slane %v155, 4
        %v157 = vadd.f32 %v155, %v156
        %v158 = vrot.slane %v157, 2
        %v159 = vadd.f32 %v157, %v158
        %v160 = vrot.slane %v159, 1
        %v161 = vadd.f32 %v159, %v160
        %v162 = vadd.f32 %v152, %v161
        %vm163 = vcmask 253952
        %164 = vst.msk [vmem:[%s145] sm:$0x1] %vm163, %v162
        // Predicated region
        $region33: #{tpu_custom_call.1} parent=23 // pred_check
          %p165 = pneg %p146
        $region34: #{tpu_custom_call.1} parent=23 // pred_check_branch
          %167 = sbr.rel (%p165) target = $region36
        $region35: #{tpu_custom_call.1} parent=23 // pred_region
          %v168 = vld [vmem:[%s145] sm:$0x1]
          %v169 = vmul.f32 %v168, 0.125
          %170 = vst.msk [vmem:[%s145] sm:$0x1] %vm163, %v169
        $region36: #{tpu_custom_call.1} parent=23 // pred_fallthru
          _
        %s171 = sand.u32 %s66, 1
        %s172 = scalar_lea.sflag [#allocation4], %s171
        %s173 = sand.u32 %s66, 1
        %s174 = scalar_lea.vmem [#allocation5], %s173
        // Predicated region
        $region37: #{tpu_custom_call.1} parent=23 // pred_check
          %p175 = pneg %p76
        $region38: #{tpu_custom_call.1} parent=23 // pred_check_branch
          %177 = sbr.rel (%p175) target = $region40
        $region39: #{tpu_custom_call.1} parent=23 // pred_region
          %s179 = ssub.s32 16, 16
          %180 = vsyncadd %s172, %s179
          %s181 = smul.addr %s22, 16
          %s182 = scalar_lea.hbm %s1, %s181
          %s184 = sshll.u32 %s174, 4
          %s185 = int_to_ptr.vmem [resolvable:$true] %s184
          %187 = dma.vmem_to_hbm [thread:$0]  %s185, 16, %s182, %s172
        $region40: #{tpu_custom_call.1} parent=23 // pred_fallthru
          _
      $region24: #{tpu_custom_call.1} parent=5 // pred_fallthru
        _
      %p188 = scmp.le.s32.totalorder 2, %s13
      // Predicated region
      $region41: #{tpu_custom_call.1} parent=5 // pred_check
        %p189 = pneg %p188
      $region42: #{tpu_custom_call.1} parent=5 // pred_check_branch
        %191 = sbr.rel (%p189) target = $region44
      $region43: #{tpu_custom_call.1} parent=5 // pred_region
        %s192 = ssub.s32 %s13, 2
        // Predicated region
        $region45: #{tpu_custom_call.1} parent=43 // pred_check
          %p193 = pneg %p82
        $region46: #{tpu_custom_call.1} parent=43 // pred_check_branch
          %195 = sbr.rel (%p193) target = $region48
        $region47: #{tpu_custom_call.1} parent=43 // pred_region
          %s196 = sand.u32 %s67, 1
          %s197 = scalar_lea.sflag [#allocation4], %s196
          %s198 = sand.u32 %s67, 1
          %s199 = scalar_lea.vmem [#allocation5], %s198
          %200 = dma.done %s197, 16
        $region48: #{tpu_custom_call.1} parent=43 // pred_fallthru
          _
      $region44: #{tpu_custom_call.1} parent=5 // pred_fallthru
        _
    $region6: #{tpu_custom_call.1} parent=1 // loop_footer
      %s17 = sadd.s32 1, %s13
    $region7: #{tpu_custom_call.1} parent=1 // loop_footer_branch
      %12 = sbr.rel target = $region3
    $region8: #{tpu_custom_call.1} parent=1 // loop_exit
      _
    %201 = vsyncpa [#allocation3], 1
    %s202 = scalar_lea.sflag [#allocation3], 1
    %203 = vsyncpa %s202, 1
    %204 = vsyncpa [#allocation4], 1
    %s205 = scalar_lea.sflag [#allocation4], 1
    %206 = vsyncpa %s205, 1

</llo_original>
